<compile_context>
chip_gen: v6e
topology: v6e:2x2x1
jax: 0.10.0
libtpu: 0.0.40
codegen_flags: <defaults>
</compile_context>

<pallas_src>
import jax
import jax.numpy as jnp
from jax import lax
from jax.experimental import pallas as pl
from jax.experimental.pallas import tpu as pltpu

LANES = 128  # vreg lane width


def _round_up(v, m):
    return (v + m - 1) // m * m


# ---------------------------------------------------------------------------
# Parameter packing (one-time, offline)
# ---------------------------------------------------------------------------
def pack_params(params, lanes=LANES):
    """Fold / transpose / lane-pad the 8 PyTorch-shaped params into one slab."""
    w1, b1, w2, b2, w3, b3, w4, b4 = params
    M, N = w1.shape
    M2 = w3.shape[0]
    assert M <= lanes and M2 < lanes, "hidden dims must fit (with a spare carrier col)"

    def pad_cols(a):
        return jnp.pad(a, ((0, 0), (0, lanes - a.shape[1])))

    w1_p = pad_cols(w1.T)                                       # [N, lanes]
    w3_p = jnp.pad(w3.T, ((0, lanes - M), (0, lanes - M2)))     # [lanes, lanes]
    b12_p = pad_cols((b1 + b2)[None, :])                        # fused bias [1, lanes]
    w2_p = pad_cols(w2.T)                                       # [1, lanes]
    # Carrier column M2: h2[:, M2] == relu(0 + 1) == 1, weight == b4  =>  +b4 per row.
    b3_p = pad_cols(b3[None, :]).at[0, M2].set(1.0)
    w4_p = pad_cols(w4).at[0, M2].set(b4[0])

    slab = jnp.concatenate([w1_p, w3_p, b12_p, w2_p, b3_p, w4_p], axis=0)
    rows = _round_up(slab.shape[0], 8)                          # sublane-align
    return jnp.pad(slab, ((0, rows - slab.shape[0]), (0, 0)))


# ---------------------------------------------------------------------------
# Kernel
# ---------------------------------------------------------------------------
def _make_kernel(N, MP):
    r = N + MP  # first small-row offset inside the packed slab

    def kernel(x_ref, t_ref, w_ref, out_ref):
        x = x_ref[...]                      # [TB, N]
        t = t_ref[...]                      # [TB, 1]
        w1 = w_ref[0:N, :]                  # [N,  MP]
        w3 = w_ref[N:r, :]                  # [MP, MP]
        b12 = w_ref[r + 0:r + 1, :]         # [1, MP]  (b1 + b2)
        w2 = w_ref[r + 1:r + 2, :]          # [1, MP]
        b3 = w_ref[r + 2:r + 3, :]          # [1, MP]  (+ carrier 1.0)
        w4 = w_ref[r + 3:r + 4, :]          # [1, MP]  (+ carrier b4)

        # linear_1(x) + linear_2(t)  (broadcast mul, not a K=1 matmul) + ReLU
        h = jnp.dot(x, w1, preferred_element_type=jnp.float32)   # [TB, MP]
        h = jnp.maximum(h + b12 + t * w2, 0.0)

        # linear_3 + ReLU
        h2 = jnp.dot(h, w3, preferred_element_type=jnp.float32)  # [TB, MP]
        h2 = jnp.maximum(h2 + b3, 0.0)

        # linear_4: contract [1, MP] with [TB, MP] over MP -> lane-dense [1, TB].
        # b4 rides in the carrier column set up by pack_params.
        y = lax.dot_general(w4, h2, (((1,), (1,)), ((), ())),
                            preferred_element_type=jnp.float32)  # [1, TB]
        out_ref[...] = y[None].astype(out_ref.dtype)             # [1, 1, TB]

    return kernel


# ---------------------------------------------------------------------------
# Wrapper
# ---------------------------------------------------------------------------
def aldnet2_forward(x, t, wpack, *, block_b=512):
    """x: [B, N] f32, t: [B, 1] f32, wpack: pack_params(...) -> [B, 1] f32."""
    B, N = x.shape
    MP = wpack.shape[1]
    assert wpack.shape[0] >= N + MP + 4

    TB = _round_up(min(block_b, B), 8)      # batch rows per grid step
    Bp = _round_up(B, TB)
    if Bp != B:
        x = jnp.pad(x, ((0, Bp - B), (0, 0)))
        t = jnp.pad(t, ((0, Bp - B), (0, 0)))
    num_tiles = Bp // TB

    out = pl.pallas_call(
        _make_kernel(N, MP),
        out_shape=jax.ShapeDtypeStruct((num_tiles, 1, TB), jnp.float32),
        grid=(num_tiles,),
        in_specs=[
            pl.BlockSpec((TB, N), lambda i: (i, 0)),          # x batch tile
            pl.BlockSpec((TB, 1), lambda i: (i, 0)),          # t batch tile
            pl.BlockSpec(wpack.shape, lambda i: (0, 0)),      # weights: VMEM-resident
        ],
        out_specs=pl.BlockSpec((1, 1, TB), lambda i: (i, 0, 0)),  # lane-dense output
        compiler_params=pltpu.CompilerParams(
            dimension_semantics=("parallel",),                # shard batch tiles on v7x
            vmem_limit_bytes=32 * 1024 * 1024,
        ),
    )(x, t, wpack)
    return out.reshape(Bp, 1)[:B]                             # layout plumbing only


# ---------------------------------------------------------------------------
# Reference / params (PyTorch nn.Linear layout: weight [out, in], bias [out])
# ---------------------------------------------------------------------------
def init_params(key, N, M, M2):
    ks = jax.random.split(key, 8)
    w1 = jax.random.normal(ks[0], (M, N), jnp.float32) / jnp.sqrt(N)
    b1 = jax.random.normal(ks[1], (M,), jnp.float32) * 0.1
    w2 = jax.random.normal(ks[2], (M, 1), jnp.float32)
    b2 = jax.random.normal(ks[3], (M,), jnp.float32) * 0.1
    w3 = jax.random.normal(ks[4], (M2, M), jnp.float32) / jnp.sqrt(M)
    b3 = jax.random.normal(ks[5], (M2,), jnp.float32) * 0.1
    w4 = jax.random.normal(ks[6], (1, M2), jnp.float32) / jnp.sqrt(M2)
    b4 = jax.random.normal(ks[7], (1,), jnp.float32) * 0.1
    return (w1, b1, w2, b2, w3, b3, w4, b4)


def aldnet2_reference(x, t, params):
    w1, b1, w2, b2, w3, b3, w4, b4 = params
    x2 = jnp.maximum(x @ w1.T + b1 + t @ w2.T + b2, 0.0)
    x3 = jnp.maximum(x2 @ w3.T + b3, 0.0)
    return x3 @ w4.T + b4


if __name__ == "__main__":
    N, M, M2 = 32, 64, 32
    B = 40                                   # small; ragged vs. the demo block size

    key = jax.random.PRNGKey(0)
    kx, kt, kp = jax.random.split(key, 3)
    x = jax.random.normal(kx, (B, N), jnp.float32)
    t = jax.random.normal(kt, (B, 1), jnp.float32)
    params = init_params(kp, N, M, M2)
    wpack = pack_params(params)              # one-time fold + transpose + lane-pad

    # Gridded path: 3 batch tiles of 16 rows + padding of the ragged tail.
    out = jax.block_until_ready(aldnet2_forward(x, t, wpack, block_b=16))
    ref = aldnet2_reference(x, t, params)
    assert out.shape == (B, 1)
    assert jnp.allclose(out, ref, atol=1e-3, rtol=1e-3), (
        f"max abs err {jnp.max(jnp.abs(out - ref))}")

    # Single-tile path with the default (VMEM-filling) block size.
    out2 = jax.block_until_ready(aldnet2_forward(x, t, wpack))
    assert jnp.allclose(out2, ref, atol=1e-3, rtol=1e-3), (
        f"max abs err {jnp.max(jnp.abs(out2 - ref))}")

    print("KERNEL_OK")
</pallas_src>

<mosaic_0001>
module attributes {stable_mosaic.version = 11 : i64} {
  func.func @kernel(%arg0: i32, %arg1: memref<16x32xf32, #tpu.memory_space<vmem>>, %arg2: memref<16x1xf32, #tpu.memory_space<vmem>>, %arg3: memref<168x128xf32, #tpu.memory_space<vmem>>, %arg4: memref<1x1x16xf32, #tpu.memory_space<vmem>>) attributes {dimension_semantics = [#tpu.dimension_semantics<parallel>], iteration_bounds = array<i64: 3>, scalar_prefetch = 0 : i64, scratch_operands = 0 : i64, tpu.core_type = #tpu.core_type<tc>, window_params = [{transform_indices = @transform_0, window_bounds = array<i64: 16, 32>}, {transform_indices = @transform_1, window_bounds = array<i64: 16, 1>}, {pipeline_mode = #tpu.pipeline_mode<synchronous>, transform_indices = @transform_2, window_bounds = array<i64: 168, 128>}, {transform_indices = @transform_3, window_bounds = array<i64: 1, 1, 16>}]} {
    %c0 = arith.constant 0 : index
    %c0_0 = arith.constant 0 : index
    %0 = vector.load %arg1[%c0, %c0_0] : memref<16x32xf32, #tpu.memory_space<vmem>>, vector<16x32xf32>
    %c0_1 = arith.constant 0 : index
    %c0_2 = arith.constant 0 : index
    %1 = vector.load %arg2[%c0_1, %c0_2] : memref<16x1xf32, #tpu.memory_space<vmem>>, vector<16x1xf32>
    %c0_3 = arith.constant 0 : index
    %c0_4 = arith.constant 0 : index
    %2 = vector.load %arg3[%c0_3, %c0_4] : memref<168x128xf32, #tpu.memory_space<vmem>>, vector<32x128xf32>
    %c32 = arith.constant 32 : index
    %c0_5 = arith.constant 0 : index
    %3 = vector.load %arg3[%c32, %c0_5] : memref<168x128xf32, #tpu.memory_space<vmem>>, vector<128x128xf32>
    %c160 = arith.constant 160 : index
    %c0_6 = arith.constant 0 : index
    %4 = vector.load %arg3[%c160, %c0_6] : memref<168x128xf32, #tpu.memory_space<vmem>>, vector<1x128xf32>
    %c161 = arith.constant 161 : index
    %c0_7 = arith.constant 0 : index
    %5 = vector.load %arg3[%c161, %c0_7] : memref<168x128xf32, #tpu.memory_space<vmem>>, vector<1x128xf32>
    %c162 = arith.constant 162 : index
    %c0_8 = arith.constant 0 : index
    %6 = vector.load %arg3[%c162, %c0_8] : memref<168x128xf32, #tpu.memory_space<vmem>>, vector<1x128xf32>
    %c163 = arith.constant 163 : index
    %c0_9 = arith.constant 0 : index
    %7 = vector.load %arg3[%c163, %c0_9] : memref<168x128xf32, #tpu.memory_space<vmem>>, vector<1x128xf32>
    %cst = arith.constant dense<0.000000e+00> : vector<16x128xf32>
    %8 = tpu.matmul %0, %2, %cst {dimension_numbers = #tpu.dot_dimension_numbers<[1], [0], [0], [1], [0, 0, 1, 1], [], []>} : vector<16x32xf32>, vector<32x128xf32>, vector<16x128xf32> -> vector<16x128xf32>
    %9 = vector.broadcast %4 : vector<1x128xf32> to vector<16x128xf32>
    %10 = arith.addf %8, %9 : vector<16x128xf32>
    %11 = vector.broadcast %1 : vector<16x1xf32> to vector<16x128xf32>
    %12 = vector.broadcast %5 : vector<1x128xf32> to vector<16x128xf32>
    %13 = arith.mulf %11, %12 : vector<16x128xf32>
    %14 = arith.addf %10, %13 : vector<16x128xf32>
    %cst_10 = arith.constant 0.000000e+00 : f32
    %15 = vector.broadcast %cst_10 : f32 to vector<16x128xf32>
    %16 = arith.maximumf %14, %15 : vector<16x128xf32>
    %cst_11 = arith.constant dense<0.000000e+00> : vector<16x128xf32>
    %17 = tpu.matmul %16, %3, %cst_11 {dimension_numbers = #tpu.dot_dimension_numbers<[1], [0], [0], [1], [0, 0, 1, 1], [], []>} : vector<16x128xf32>, vector<128x128xf32>, vector<16x128xf32> -> vector<16x128xf32>
    %18 = vector.broadcast %6 : vector<1x128xf32> to vector<16x128xf32>
    %19 = arith.addf %17, %18 : vector<16x128xf32>
    %cst_12 = arith.constant 0.000000e+00 : f32
    %20 = vector.broadcast %cst_12 : f32 to vector<16x128xf32>
    %21 = arith.maximumf %19, %20 : vector<16x128xf32>
    %cst_13 = arith.constant dense<0.000000e+00> : vector<1x16xf32>
    %22 = tpu.matmul %7, %21, %cst_13 {dimension_numbers = #tpu.dot_dimension_numbers<[1], [1], [0], [0], [0, 0, 1, 0], [], []>} : vector<1x128xf32>, vector<16x128xf32>, vector<1x16xf32> -> vector<1x16xf32>
    %23 = vector.shape_cast %22 : vector<1x16xf32> to vector<1x1x16xf32>
    %c0_14 = arith.constant 0 : index
    %c0_15 = arith.constant 0 : index
    %c0_16 = arith.constant 0 : index
    %24 = vector.load %arg4[%c0_14, %c0_15, %c0_16] : memref<1x1x16xf32, #tpu.memory_space<vmem>>, vector<1x1x16xf32>
    tpu.vector_store %arg4[%c0_14, %c0_15, %c0_16], %23 {strides = array<i32>} : memref<1x1x16xf32, #tpu.memory_space<vmem>>, vector<1x1x16xf32>,
    return
  }
  func.func @transform_0(%arg0: i32) -> (i32, i32) {
    %c0_i32 = arith.constant 0 : i32
    %c0_i32_0 = arith.constant 0 : i32
    return %arg0, %c0_i32 : i32, i32
  }
  func.func @transform_1(%arg0: i32) -> (i32, i32) {
    %c0_i32 = arith.constant 0 : i32
    %c0_i32_0 = arith.constant 0 : i32
    return %arg0, %c0_i32 : i32, i32
  }
  func.func @transform_2(%arg0: i32) -> (i32, i32) {
    %c0_i32 = arith.constant 0 : i32
    %c0_i32_0 = arith.constant 0 : i32
    %c0_i32_1 = arith.constant 0 : i32
    return %c0_i32, %c0_i32_0 : i32, i32
  }
  func.func @transform_3(%arg0: i32) -> (i32, i32, i32) {
    %c0_i32 = arith.constant 0 : i32
    %c0_i32_0 = arith.constant 0 : i32
    %c0_i32_1 = arith.constant 0 : i32
    return %arg0, %c0_i32, %c0_i32_0 : i32, i32, i32
  }
}

</mosaic_0001>

<llo_original>
// kernel: tpu_custom_call.1
$region0: #{tpu_custom_call.1}
  #allocation0 [shape = 'u32[]', space=smem, size = 0x4, offset = 0x4, fixed_abs, tag = 'smem constant byte address 0x4 - core index']
  #allocation1 [shape = 'u32[144,128]{1,0:T(1,128)}', space=vmem, size = 0x12000, scoped, tag = 'internal scratch']
  %s0 = inlined_call_operand.vmem [shape: f32[48,32], index: 0, kind: input, shape index: {}]
  %s1 = inlined_call_operand.vmem [shape: f32[48,1], index: 1, kind: input, shape index: {}]
  %s2 = inlined_call_operand.hbm [shape: f32[168,128], index: 2, kind: input, shape index: {}]
  %s3 = inlined_call_operand.hbm [shape: f32[3,1,16], index: 3, kind: output, shape index: {}]
  %s4 = sld [smem:[#allocation0]]
  $region49: #{tpu_custom_call.1} parent=0
    _
  %s6 = ssub.s32 1, %s4
  %s7 = scalar_select 0, %s6, %s4
  $region1: #{tpu_custom_call.1} parent=0
    #allocation2 [shape = 'u8[86016]{0}', space=vmem, size = 0x15000, scoped, tag = 'input window, operand 2, single buffered']
    #allocation3 [shape = 's32[2]{0}', space=sflag, size = 0x8, scoped, tag = 'scoped memory for tpu_custom_call.1']
    #allocation4 [shape = 's32[2]{0}', space=sflag, size = 0x8, scoped, tag = 'scoped memory for tpu_custom_call.1']
    #allocation5 [shape = 'u8[1024]{0}', space=vmem, size = 0x400, scoped, tag = 'output window, operand 0']
    %8 = vsyncpa [#allocation3], 0
    %9 = vsyncpa [#allocation4], 0
    %s10 = scalar_lea.sflag [#allocation4], 1
    %11 = vsyncpa %s10, 0
    loop: start=0, step=1, limit=5
    $region2: #{tpu_custom_call.1} parent=1 // loop_pre_header
      _
    $region3: #{tpu_custom_call.1} parent=1 // loop_header
      %s13 = sphi 0, %s17
      %p14 = scmp.ge.s32.totalorder %s13, 5
      %s23 = sphi 0, %s25
      %s26 = sphi 0, %s23
      %s27 = sphi 0, %s26
      %s43 = sphi 0, %s27
      %s49 = sphi 0, %s51
      %s52 = sphi 0, %s49
      %s53 = sphi 0, %s52
      %s69 = sphi 0, %s53
      %s73 = sphi 0, %s73
      %s75 = sphi 0, %s73
      %s76 = sphi 0, %s75
      %s90 = sphi 0, %s76
      %s96 = sphi 0, %s98
      %s99 = sphi 0, %s96
      %s100 = sphi 0, %s99
      %s116 = sphi 0, %s100
    $region4: #{tpu_custom_call.1} parent=1 // loop_header_branch
      %16 = sbr.rel (%p14) target = $region8
    $region5: #{tpu_custom_call.1} parent=1 // loop_body
      %s18 = ssub.s32 %s13, 1
      %s19 = ssub.s32 %s13, 2
      %s20 = sadd.s32 %s13, 1
      %s21 = ssub.s32 %s13, %s20
      %p22 = scmp.eq.s32.totalorder %s21, 0
      %s24 = sadd.s32 %s23, 1
      %s25 = scalar_select %p22, %s23, %s24
      %p28 = pneg %p22
      %p29 = scmp.eq.s32.totalorder %s13, 2
      %p30 = por %p28, %p29
      %p31 = scmp.ne.s32.totalorder %s23, %s26
      %p32 = scmp.eq.s32.totalorder %s13, 0
      %p33 = por %p31, %p32
      %p34 = scmp.ne.s32.totalorder %s23, %s26
      %p35 = scmp.eq.s32.totalorder %s18, 2
      %p36 = por %p34, %p35
      %p37 = scmp.ne.s32.totalorder %s26, %s27
      %p38 = scmp.eq.s32.totalorder %s18, 0
      %p39 = por %p37, %p38
      %p40 = scmp.ne.s32.totalorder %s26, %s27
      %p41 = scmp.eq.s32.totalorder %s19, 2
      %p42 = por %p40, %p41
      %p44 = scmp.ne.s32.totalorder %s27, %s43
      %p45 = scmp.eq.s32.totalorder %s19, 0
      %p46 = por %p44, %p45
      %s47 = ssub.s32 %s13, %s20
      %p48 = scmp.eq.s32.totalorder %s47, 0
      %s50 = sadd.s32 %s49, 1
      %s51 = scalar_select %p48, %s49, %s50
      %p54 = pneg %p48
      %p55 = scmp.eq.s32.totalorder %s13, 2
      %p56 = por %p54, %p55
      %p57 = scmp.ne.s32.totalorder %s49, %s52
      %p58 = scmp.eq.s32.totalorder %s13, 0
      %p59 = por %p57, %p58
      %p60 = scmp.ne.s32.totalorder %s49, %s52
      %p61 = scmp.eq.s32.totalorder %s18, 2
      %p62 = por %p60, %p61
      %p63 = scmp.ne.s32.totalorder %s52, %s53
      %p64 = scmp.eq.s32.totalorder %s18, 0
      %p65 = por %p63, %p64
      %p66 = scmp.ne.s32.totalorder %s52, %s53
      %p67 = scmp.eq.s32.totalorder %s19, 2
      %p68 = por %p66, %p67
      %p70 = scmp.ne.s32.totalorder %s53, %s69
      %p71 = scmp.eq.s32.totalorder %s19, 0
      %p72 = por %p70, %p71
      %s74 = sadd.s32 %s73, 1
      %p77 = scmp.eq.s32.totalorder %s13, 2
      %p78 = scmp.ne.s32.totalorder %s73, %s75
      %p79 = scmp.eq.s32.totalorder %s13, 0
      %p80 = por %p78, %p79
      %p81 = scmp.ne.s32.totalorder %s73, %s75
      %p82 = scmp.eq.s32.totalorder %s18, 2
      %p83 = por %p81, %p82
      %p84 = scmp.ne.s32.totalorder %s75, %s76
      %p85 = scmp.eq.s32.totalorder %s18, 0
      %p86 = por %p84, %p85
      %p87 = scmp.ne.s32.totalorder %s75, %s76
      %p88 = scmp.eq.s32.totalorder %s19, 2
      %p89 = por %p87, %p88
      %p91 = scmp.ne.s32.totalorder %s76, %s90
      %p92 = scmp.eq.s32.totalorder %s19, 0
      %p93 = por %p91, %p92
      %s94 = ssub.s32 %s13, %s20
      %p95 = scmp.eq.s32.totalorder %s94, 0
      %s97 = sadd.s32 %s96, 1
      %s98 = scalar_select %p95, %s96, %s97
      %p101 = pneg %p95
      %p102 = scmp.eq.s32.totalorder %s13, 2
      %p103 = por %p101, %p102
      %p104 = scmp.ne.s32.totalorder %s96, %s99
      %p105 = scmp.eq.s32.totalorder %s13, 0
      %p106 = por %p104, %p105
      %p107 = scmp.ne.s32.totalorder %s96, %s99
      %p108 = scmp.eq.s32.totalorder %s18, 2
      %p109 = por %p107, %p108
      %p110 = scmp.ne.s32.totalorder %s99, %s100
      %p111 = scmp.eq.s32.totalorder %s18, 0
      %p112 = por %p110, %p111
      %p113 = scmp.ne.s32.totalorder %s99, %s100
      %p114 = scmp.eq.s32.totalorder %s19, 2
      %p115 = por %p113, %p114
      %p117 = scmp.ne.s32.totalorder %s100, %s116
      %p118 = scmp.eq.s32.totalorder %s19, 0
      %p119 = por %p117, %p118
      %p120 = scmp.le.s32.totalorder 1, %s13
      %p121 = scmp.lt.s32.totalorder %s13, 4
      %p122 = pnand %p120, %p121
      %p123 = pneg %p122
      // Predicated region
      $region9: #{tpu_custom_call.1} parent=5 // pred_check
        _
      $region10: #{tpu_custom_call.1} parent=5 // pred_check_branch
        %125 = sbr.rel (%p122) target = $region12
      $region11: #{tpu_custom_call.1} parent=5 // pred_region
        %s126 = ssub.s32 %s13, 1
        // Predicated region
        $region13: #{tpu_custom_call.1} parent=11 // pred_check
          %p127 = pneg %p86
        $region14: #{tpu_custom_call.1} parent=11 // pred_check_branch
          %129 = sbr.rel (%p127) target = $region16
        $region15: #{tpu_custom_call.1} parent=11 // pred_region
          %s131 = ssub.s32 2688, 2688
          %132 = vsyncadd [#allocation3], %s131
          %s133 = sshll.u32 [#allocation2], 4
          %s134 = int_to_ptr.vmem [resolvable:$true] %s133
          %139 = dma.hbm_to_vmem [thread:$0]  %s2, 2688, %s134, [#allocation3], 128, 128, 8
        $region16: #{tpu_custom_call.1} parent=11 // pred_fallthru
          _
      $region12: #{tpu_custom_call.1} parent=5 // pred_fallthru
        _
      %p140 = scmp.lt.s32.totalorder %s13, 3
      // Predicated region
      $region17: #{tpu_custom_call.1} parent=5 // pred_check
        %p141 = pneg %p140
      $region18: #{tpu_custom_call.1} parent=5 // pred_check_branch
        %143 = sbr.rel (%p141) target = $region20
      $region19: #{tpu_custom_call.1} parent=5 // pred_region
        // Predicated region
        $region21: #{tpu_custom_call.1} parent=19 // pred_check
          %p144 = pneg %p33
        $region22: #{tpu_custom_call.1} parent=19 // pred_check_branch
          %146 = sbr.rel (%p144) target = $region24
        $region23: #{tpu_custom_call.1} parent=19 // pred_region
          %s147 = smul.u32 2, %s13
          %p148 = scmp.lt.s32.totalorder %s147, 5
          %s149 = scalar_select %p148, %s147, 5
          %s150 = smul.addr %s149, 8
          %s151 = scalar_lea.vmem %s0, %s150
          %s152 = smul.u32 2, %s13
        $region24: #{tpu_custom_call.1} parent=19 // pred_fallthru
          _
        // Predicated region
        $region25: #{tpu_custom_call.1} parent=19 // pred_check
          %p153 = pneg %p59
        $region26: #{tpu_custom_call.1} parent=19 // pred_check_branch
          %155 = sbr.rel (%p153) target = $region28
        $region27: #{tpu_custom_call.1} parent=19 // pred_region
          %s156 = smul.u32 2, %s13
          %p157 = scmp.lt.s32.totalorder %s156, 5
          %s158 = scalar_select %p157, %s156, 5
          %s159 = smul.addr %s158, 8
          %s160 = scalar_lea.vmem %s1, %s159
          %s161 = smul.u32 2, %s13
        $region28: #{tpu_custom_call.1} parent=19 // pred_fallthru
          _
      $region20: #{tpu_custom_call.1} parent=5 // pred_fallthru
        _
      %p162 = scmp.le.s32.totalorder 1, %s13
      %p163 = scmp.lt.s32.totalorder %s13, 4
      %p164 = pnand %p162, %p163
      %p165 = pneg %p164
      // Predicated region
      $region29: #{tpu_custom_call.1} parent=5 // pred_check
        _
      $region30: #{tpu_custom_call.1} parent=5 // pred_check_branch
        %167 = sbr.rel (%p164) target = $region32
      $region31: #{tpu_custom_call.1} parent=5 // pred_region
        %s168 = ssub.s32 %s13, 1
        // Predicated region
        $region33: #{tpu_custom_call.1} parent=31 // pred_check
          %p169 = pneg %p86
        $region34: #{tpu_custom_call.1} parent=31 // pred_check_branch
          %171 = sbr.rel (%p169) target = $region36
        $region35: #{tpu_custom_call.1} parent=31 // pred_region
          %172 = dma.done [#allocation3], 2688
        $region36: #{tpu_custom_call.1} parent=31 // pred_fallthru
          _
        %s173 = smul.u32 2, %s18
        %p174 = scmp.lt.s32.totalorder %s173, 5
        %s175 = scalar_select %p174, %s173, 5
        %s176 = smul.addr %s175, 8
        %s177 = scalar_lea.vmem %s0, %s176
        %p178 = pneg %p39
        %p179 = pneg %p36
        %s180 = smul.u32 2, %s18
        %p181 = scmp.lt.s32.totalorder %s180, 5
        %s182 = scalar_select %p181, %s180, 5
        %s183 = smul.addr %s182, 8
        %s184 = scalar_lea.vmem %s1, %s183
        %p185 = pneg %p65
        %p186 = pneg %p62
        %p187 = pneg %p86
        %p188 = pneg %p83
        %p189 = pneg %p112
        %p190 = pneg %p109
        %s191 = sand.u32 %s99, 1
        %s192 = scalar_lea.sflag [#allocation4], %s191
        %s193 = sand.u32 %s99, 1
        %s194 = scalar_lea.vmem [#allocation5], %s193
        %s195 = smul.u32 2, %s18
        %p196 = scmp.lt.s32.totalorder %s195, 5
        %s197 = scalar_select %p196, %s195, 5
        %s198 = smul.addr %s197, 8
        %s199 = scalar_lea.vmem %s0, %s198
        %s200 = smul.u32 2, %s18
        %s201 = smul.u32 2, %s18
        %p202 = scmp.lt.s32.totalorder %s201, 5
        %s203 = scalar_select %p202, %s201, 5
        %s204 = smul.addr %s203, 8
        %s205 = scalar_lea.vmem %s1, %s204
        %s206 = smul.u32 2, %s18
        %v207 = vld [vmem:[%s199] sm:$0xff]
        %v208 = vld [vmem:[%s199 + $0x8] sm:$0xff]
        %v209 = vld [vmem:[%s205] sm:$0xff]
        %v210 = vld [vmem:[%s205 + $0x8] sm:$0xff]
        %v211 = vld [vmem:[#allocation2] sm:$0xff]
        %v212 = vld [vmem:[#allocation2 + $0x8] sm:$0xff]
        %v213 = vld [vmem:[#allocation2 + $0x10] sm:$0xff]
        %v214 = vld [vmem:[#allocation2 + $0x18] sm:$0xff]
        %v215 = vld [vmem:[#allocation2 + $0x20] sm:$0xff]
        %v216 = vld [vmem:[#allocation2 + $0x28] sm:$0xff]
        %v217 = vld [vmem:[#allocation2 + $0x30] sm:$0xff]
        %v218 = vld [vmem:[#allocation2 + $0x38] sm:$0xff]
        %v219 = vld [vmem:[#allocation2 + $0x40] sm:$0xff]
        %v220 = vld [vmem:[#allocation2 + $0x48] sm:$0xff]
        %v221 = vld [vmem:[#allocation2 + $0x50] sm:$0xff]
        %v222 = vld [vmem:[#allocation2 + $0x58] sm:$0xff]
        %v223 = vld [vmem:[#allocation2 + $0x60] sm:$0xff]
        %v224 = vld [vmem:[#allocation2 + $0x68] sm:$0xff]
        %v225 = vld [vmem:[#allocation2 + $0x70] sm:$0xff]
        %v226 = vld [vmem:[#allocation2 + $0x78] sm:$0xff]
        %v227 = vld [vmem:[#allocation2 + $0x80] sm:$0xff]
        %v228 = vld [vmem:[#allocation2 + $0x88] sm:$0xff]
        %v229 = vld [vmem:[#allocation2 + $0x90] sm:$0xff]
        %v230 = vld [vmem:[#allocation2 + $0x98] sm:$0xff]
        %v231 = vld [vmem:[#allocation2 + $0xa0] sm:$0x1]
        %v232 = vld [vmem:[#allocation2 + $0xa1] sm:$0x1]
        %v233 = vld [vmem:[#allocation2 + $0xa2] sm:$0x1]
        %v234 = vld [vmem:[#allocation2 + $0xa3] sm:$0x1]
        %v235 = vlaneseq
        %v236 = vshrl.u32 %v235, 7
        %v237 = vsub.s32 0, %v236
        %v238 = vrot.slane %v231, %v237
        %vm239 = vcmask 261120
        %v241 = vsel %vm239, %v207, 0
        %v244 = vsel %vm239, %v208, 0
        %246 = vmatprep.subr.mxu0 0.0
        %247 = vmatpush1.msra.mxu0 0.0
        %248 = vmatprep.subr.mxu0 0.0
        %249 = vmatpush1.msra.mxu0 0.0
        %250 = vmatprep.subr.mxu0 0.0
        %251 = vmatpush1.msra.mxu0 0.0
        %252 = vmatprep.subr.mxu0 0.0
        %253 = vmatpush1.msra.mxu0 0.0
        %254 = vmatprep.subr.mxu0 0.0
        %255 = vmatpush1.msra.mxu0 0.0
        %256 = vmatprep.subr.mxu0 0.0
        %257 = vmatpush1.msra.mxu0 0.0
        %258 = vmatprep.subr.mxu0 0.0
        %259 = vmatpush1.msra.mxu0 0.0
        %260 = vmatprep.subr.mxu0 0.0
        %261 = vmatpush1.msra.mxu0 0.0
        %262 = vmatprep.subr.mxu0 0.0
        %263 = vmatpush1.msra.mxu0 0.0
        %264 = vmatprep.subr.mxu0 0.0
        %265 = vmatpush1.msra.mxu0 0.0
        %266 = vmatprep.subr.mxu0 0.0
        %267 = vmatpush1.msra.mxu0 0.0
        %268 = vmatprep.subr.mxu0 0.0
        %269 = vmatpush1.msra.mxu0 0.0
        %270 = vmatprep.subr.mxu0 0.0
        %271 = vmatpush1.msra.mxu0 %v214
        %272 = vmatprep.subr.mxu0 0.0
        %273 = vmatpush1.msra.mxu0 %v213
        %274 = vmatprep.subr.mxu0 0.0
        %275 = vmatpush1.msra.mxu0 %v212
        %276 = vmatprep.subr.mxu0 0.0
        %277 = vmatpush1.msra.mxu0 %v211
        %278 = vmatprep.subr.mxu0 0.0
        %279 = vmatpush2.msra.mxu0 0.0
        %280 = vmatprep.subr.mxu0 0.0
        %281 = vmatpush2.msra.mxu0 0.0
        %282 = vmatprep.subr.mxu0 0.0
        %283 = vmatpush2.msra.mxu0 0.0
        %284 = vmatprep.subr.mxu0 0.0
        %285 = vmatpush2.msra.mxu0 0.0
        %286 = vmatprep.subr.mxu0 0.0
        %287 = vmatpush2.msra.mxu0 0.0
        %288 = vmatprep.subr.mxu0 0.0
        %289 = vmatpush2.msra.mxu0 0.0
        %290 = vmatprep.subr.mxu0 0.0
        %291 = vmatpush2.msra.mxu0 0.0
        %292 = vmatprep.subr.mxu0 0.0
        %293 = vmatpush2.msra.mxu0 0.0
        %294 = vmatprep.subr.mxu0 0.0
        %295 = vmatpush2.msra.mxu0 0.0
        %296 = vmatprep.subr.mxu0 0.0
        %297 = vmatpush2.msra.mxu0 0.0
        %298 = vmatprep.subr.mxu0 0.0
        %299 = vmatpush2.msra.mxu0 0.0
        %300 = vmatprep.subr.mxu0 0.0
        %301 = vmatpush2.msra.mxu0 0.0
        %302 = vmatprep.subr.mxu0 0.0
        %303 = vmatpush2.msra.mxu0 0.0
        %304 = vmatprep.subr.mxu0 0.0
        %305 = vmatpush2.msra.mxu0 0.0
        %306 = vmatprep.subr.mxu0 0.0
        %307 = vmatpush2.msra.mxu0 0.0
        %308 = vmatprep.subr.mxu0 0.0
        %309 = vmatpush2.msra.mxu0 0.0
        %310 = vmatprep.mubr.f32.mxu0 0.0
        %311 = vmatmul.mubr.f32.gmra.mxu0 %v241
        %v312 = vpop.f32.mrf.mxu0
        %v313 = vadd.f32 %v238, %v312
        %v314 = vpop.f32.mrf.mxu0
        %315 = vmatprep.mubr.f32.mxu0 0.0
        %316 = vmatmul.mubr.f32.gmra.mxu0 %v244
        %v317 = vpop.f32.mrf.mxu0
        %v318 = vadd.f32 %v238, %v317
        %v319 = vpop.f32.mrf.mxu0
        %320 = vdwg.mxu0
        %322 = vset.pattern.permute.xlu0 0
        %323 = vperm.xlu0 %322, %v209
        %v324 = vpop.permute.xlu0 %323
        %327 = vset.pattern.permute.xlu0 0
        %328 = vperm.xlu0 %327, %v210
        %v329 = vpop.permute.xlu0 %328
        %v331 = vlaneseq
        %v332 = vshrl.u32 %v331, 7
        %v333 = vsub.s32 0, %v332
        %v334 = vrot.slane %v232, %v333
        %v335 = vmul.f32 %v324, %v334
        %v336 = vmul.f32 %v329, %v334
        %v337 = vadd.f32 %v313, %v335
        %v338 = vadd.f32 %v318, %v336
        %v339 = vmax.f32 %v337, 0.0
        %v340 = vmax.f32 %v338, 0.0
        %v341 = vlaneseq
        %v342 = vshrl.u32 %v341, 7
        %v343 = vsub.s32 0, %v342
        %v344 = vrot.slane %v233, %v343
        %345 = vmatprep.subr.mxu0 0.0
        %346 = vmatpush1.msra.mxu0 %v230
        %347 = vmatprep.subr.mxu0 0.0
        %348 = vmatpush1.msra.mxu0 %v229
        %349 = vmatprep.subr.mxu0 0.0
        %350 = vmatpush1.msra.mxu0 %v228
        %351 = vmatprep.subr.mxu0 0.0
        %352 = vmatpush1.msra.mxu0 %v227
        %353 = vmatprep.subr.mxu0 0.0
        %354 = vmatpush1.msra.mxu0 %v226
        %355 = vmatprep.subr.mxu0 0.0
        %356 = vmatpush1.msra.mxu0 %v225
        %357 = vmatprep.subr.mxu0 0.0
        %358 = vmatpush1.msra.mxu0 %v224
        %359 = vmatprep.subr.mxu0 0.0
        %360 = vmatpush1.msra.mxu0 %v223
        %361 = vmatprep.subr.mxu0 0.0
        %362 = vmatpush1.msra.mxu0 %v222
        %363 = vmatprep.subr.mxu0 0.0
        %364 = vmatpush1.msra.mxu0 %v221
        %365 = vmatprep.subr.mxu0 0.0
        %366 = vmatpush1.msra.mxu0 %v220
        %367 = vmatprep.subr.mxu0 0.0
        %368 = vmatpush1.msra.mxu0 %v219
        %369 = vmatprep.subr.mxu0 0.0
        %370 = vmatpush1.msra.mxu0 %v218
        %371 = vmatprep.subr.mxu0 0.0
        %372 = vmatpush1.msra.mxu0 %v217
        %373 = vmatprep.subr.mxu0 0.0
        %374 = vmatpush1.msra.mxu0 %v216
        %375 = vmatprep.subr.mxu0 0.0
        %376 = vmatpush1.msra.mxu0 %v215
        %377 = vmatprep.subr.mxu0 0.0
        %378 = vmatpush2.msra.mxu0 0.0
        %379 = vmatprep.subr.mxu0 0.0
        %380 = vmatpush2.msra.mxu0 0.0
        %381 = vmatprep.subr.mxu0 0.0
        %382 = vmatpush2.msra.mxu0 0.0
        %383 = vmatprep.subr.mxu0 0.0
        %384 = vmatpush2.msra.mxu0 0.0
        %385 = vmatprep.subr.mxu0 0.0
        %386 = vmatpush2.msra.mxu0 0.0
        %387 = vmatprep.subr.mxu0 0.0
        %388 = vmatpush2.msra.mxu0 0.0
        %389 = vmatprep.subr.mxu0 0.0
        %390 = vmatpush2.msra.mxu0 0.0
        %391 = vmatprep.subr.mxu0 0.0
        %392 = vmatpush2.msra.mxu0 0.0
        %393 = vmatprep.subr.mxu0 0.0
        %394 = vmatpush2.msra.mxu0 0.0
        %395 = vmatprep.subr.mxu0 0.0
        %396 = vmatpush2.msra.mxu0 0.0
        %397 = vmatprep.subr.mxu0 0.0
        %398 = vmatpush2.msra.mxu0 0.0
        %399 = vmatprep.subr.mxu0 0.0
        %400 = vmatpush2.msra.mxu0 0.0
        %401 = vmatprep.subr.mxu0 0.0
        %402 = vmatpush2.msra.mxu0 0.0
        %403 = vmatprep.subr.mxu0 0.0
        %404 = vmatpush2.msra.mxu0 0.0
        %405 = vmatprep.subr.mxu0 0.0
        %406 = vmatpush2.msra.mxu0 0.0
        %407 = vmatprep.subr.mxu0 0.0
        %408 = vmatpush2.msra.mxu0 0.0
        %409 = vmatprep.mubr.f32.mxu0 0.0
        %410 = vmatmul.mubr.f32.gmra.mxu0 %v339
        %v411 = vpop.f32.mrf.mxu0
        %v412 = vadd.f32 %v344, %v411
        %v413 = vpop.f32.mrf.mxu0
        %414 = vmatprep.mubr.f32.mxu0 0.0
        %415 = vmatmul.mubr.f32.gmra.mxu0 %v340
        %v416 = vpop.f32.mrf.mxu0
        %v417 = vadd.f32 %v344, %v416
        %v418 = vpop.f32.mrf.mxu0
        %419 = vdwg.mxu0
        %v420 = vmax.f32 %v412, 0.0
        %v421 = vmax.f32 %v417, 0.0
        %422 = vmatprep.subr.mxu0 0.0
        %423 = vmatpush1.xpose.msra.mxu0 0.0
        %424 = vmatprep.subr.mxu0 0.0
        %425 = vmatpush1.xpose.msra.mxu0 0.0
        %426 = vmatprep.subr.mxu0 0.0
        %427 = vmatpush1.xpose.msra.mxu0 0.0
        %428 = vmatprep.subr.mxu0 0.0
        %429 = vmatpush1.xpose.msra.mxu0 0.0
        %430 = vmatprep.subr.mxu0 0.0
        %431 = vmatpush1.xpose.msra.mxu0 0.0
        %432 = vmatprep.subr.mxu0 0.0
        %433 = vmatpush1.xpose.msra.mxu0 0.0
        %434 = vmatprep.subr.mxu0 0.0
        %435 = vmatpush1.xpose.msra.mxu0 0.0
        %436 = vmatprep.subr.mxu0 0.0
        %437 = vmatpush1.xpose.msra.mxu0 0.0
        %438 = vmatprep.subr.mxu0 0.0
        %439 = vmatpush1.xpose.msra.mxu0 0.0
        %440 = vmatprep.subr.mxu0 0.0
        %441 = vmatpush1.xpose.msra.mxu0 0.0
        %442 = vmatprep.subr.mxu0 0.0
        %443 = vmatpush1.xpose.msra.mxu0 0.0
        %444 = vmatprep.subr.mxu0 0.0
        %445 = vmatpush1.xpose.msra.mxu0 0.0
        %446 = vmatprep.subr.mxu0 0.0
        %447 = vmatpush1.xpose.msra.mxu0 0.0
        %448 = vmatprep.subr.mxu0 0.0
        %449 = vmatpush1.xpose.msra.mxu0 0.0
        %450 = vmatprep.subr.mxu0 0.0
        %451 = vmatpush1.xpose.msra.mxu0 %v421
        %452 = vmatprep.subr.mxu0 0.0
        %453 = vmatpush1.xpose.msra.mxu0 %v420
        %454 = vmatprep.subr.mxu0 0.0
        %455 = vmatpush2.xpose.msra.mxu0 0.0
        %456 = vmatprep.subr.mxu0 0.0
        %457 = vmatpush2.xpose.msra.mxu0 0.0
        %458 = vmatprep.subr.mxu0 0.0
        %459 = vmatpush2.xpose.msra.mxu0 0.0
        %460 = vmatprep.subr.mxu0 0.0
        %461 = vmatpush2.xpose.msra.mxu0 0.0
        %462 = vmatprep.subr.mxu0 0.0
        %463 = vmatpush2.xpose.msra.mxu0 0.0
        %464 = vmatprep.subr.mxu0 0.0
        %465 = vmatpush2.xpose.msra.mxu0 0.0
        %466 = vmatprep.subr.mxu0 0.0
        %467 = vmatpush2.xpose.msra.mxu0 0.0
        %468 = vmatprep.subr.mxu0 0.0
        %469 = vmatpush2.xpose.msra.mxu0 0.0
        %470 = vmatprep.subr.mxu0 0.0
        %471 = vmatpush2.xpose.msra.mxu0 0.0
        %472 = vmatprep.subr.mxu0 0.0
        %473 = vmatpush2.xpose.msra.mxu0 0.0
        %474 = vmatprep.subr.mxu0 0.0
        %475 = vmatpush2.xpose.msra.mxu0 0.0
        %476 = vmatprep.subr.mxu0 0.0
        %477 = vmatpush2.xpose.msra.mxu0 0.0
        %478 = vmatprep.subr.mxu0 0.0
        %479 = vmatpush2.xpose.msra.mxu0 0.0
        %480 = vmatprep.subr.mxu0 0.0
        %481 = vmatpush2.xpose.msra.mxu0 0.0
        %482 = vmatprep.subr.mxu0 0.0
        %483 = vmatpush2.xpose.msra.mxu0 0.0
        %484 = vmatprep.subr.mxu0 0.0
        %485 = vmatpush2.xpose.msra.mxu0 0.0
        %486 = vmatprep.mubr.f32.mxu0 0.0
        %487 = vmatmul.mubr.f32.gmra.mxu0 %v234
        %v488 = vpop.f32.mrf.mxu0
        %v489 = vadd.f32 0.0, %v488
        %v490 = vpop.f32.mrf.mxu0
        %491 = vdwg.mxu0
        %vm492 = vcmask 122880
        %493 = vst.msk [vmem:[%s194] sm:$0x1] %vm492, %v489
        %s494 = sand.u32 %s99, 1
        %s495 = scalar_lea.sflag [#allocation4], %s494
        %s496 = sand.u32 %s99, 1
        %s497 = scalar_lea.vmem [#allocation5], %s496
        // Predicated region
        $region37: #{tpu_custom_call.1} parent=31 // pred_check
          %p498 = pneg %p109
        $region38: #{tpu_custom_call.1} parent=31 // pred_check_branch
          %500 = sbr.rel (%p498) target = $region40
        $region39: #{tpu_custom_call.1} parent=31 // pred_region
          %s502 = ssub.s32 16, 16
          %503 = vsyncadd %s495, %s502
          %s504 = smul.addr %s18, 16
          %s505 = scalar_lea.hbm %s3, %s504
          %s507 = sshll.u32 %s497, 4
          %s508 = int_to_ptr.vmem [resolvable:$true] %s507
          %510 = dma.vmem_to_hbm [thread:$0]  %s508, 16, %s505, %s495
        $region40: #{tpu_custom_call.1} parent=31 // pred_fallthru
          _
      $region32: #{tpu_custom_call.1} parent=5 // pred_fallthru
        _
      %p511 = scmp.le.s32.totalorder 2, %s13
      // Predicated region
      $region41: #{tpu_custom_call.1} parent=5 // pred_check
        %p512 = pneg %p511
      $region42: #{tpu_custom_call.1} parent=5 // pred_check_branch
        %514 = sbr.rel (%p512) target = $region44
      $region43: #{tpu_custom_call.1} parent=5 // pred_region
        %s515 = ssub.s32 %s13, 2
        // Predicated region
        $region45: #{tpu_custom_call.1} parent=43 // pred_check
          %p516 = pneg %p115
        $region46: #{tpu_custom_call.1} parent=43 // pred_check_branch
          %518 = sbr.rel (%p516) target = $region48
        $region47: #{tpu_custom_call.1} parent=43 // pred_region
          %s519 = sand.u32 %s100, 1
          %s520 = scalar_lea.sflag [#allocation4], %s519
          %s521 = sand.u32 %s100, 1
          %s522 = scalar_lea.vmem [#allocation5], %s521
          %523 = dma.done %s520, 16
        $region48: #{tpu_custom_call.1} parent=43 // pred_fallthru
          _
      $region44: #{tpu_custom_call.1} parent=5 // pred_fallthru
        _
    $region6: #{tpu_custom_call.1} parent=1 // loop_footer
      %s17 = sadd.s32 1, %s13
    $region7: #{tpu_custom_call.1} parent=1 // loop_footer_branch
      %12 = sbr.rel target = $region3
    $region8: #{tpu_custom_call.1} parent=1 // loop_exit
      _
    %524 = vsyncpa [#allocation3], 1
    %s525 = scalar_lea.sflag [#allocation3], 1
    %526 = vsyncpa %s525, 1
    %527 = vsyncpa [#allocation4], 1
    %s528 = scalar_lea.sflag [#allocation4], 1
    %529 = vsyncpa %s528, 1

</llo_original>
